<compile_context>
chip_gen: v6e
topology: v6e:2x2x1
jax: 0.10.0
libtpu: 0.0.40
codegen_flags: <defaults>
</compile_context>

<pallas_src>
import functools

import jax
import jax.numpy as jnp
from jax.experimental import pallas as pl
from jax.experimental.pallas import tpu as pltpu


def _int_pow(x, n: int):
    """x ** n for integer n >= 1 via exponentiation-by-squaring (VPU multiplies)."""
    result = None
    base = x
    while n > 0:
        if n & 1:
            result = base if result is None else result * base
        n >>= 1
        if n:
            base = base * base
    return result


def _degree_scaler_kernel(degree_ref, out_ref, *, alpha: int, inv_avg_log_degree: float):
    if alpha == 0:
        # torch semantics: x ** 0 == 1 everywhere (including 0 ** 0).
        out_ref[...] = jnp.ones(out_ref.shape, out_ref.dtype)
        return

    # Compute in f32 (v5e VPU/EUP have no bf16 anyway); cast back on store.
    d = degree_ref[...].astype(jnp.float32)
    x = jnp.log(d + 1.0) * jnp.float32(inv_avg_log_degree)

    y = _int_pow(x, abs(int(alpha)))
    if alpha < 0:
        y = 1.0 / y

    out_ref[...] = y.astype(out_ref.dtype)


def degree_scaler(degree: jax.Array, alpha: int = 0, avg_log_degree: float = 1.0) -> jax.Array:
    """Pallas implementation of DegreeScaler.forward.

    degree: array of any shape (integer dtypes are cast to float32).
    alpha:  compile-time integer exponent.
    Returns an array of the same shape; dtype is float (float32 for int inputs).
    """
    alpha = int(alpha)
    orig_shape = degree.shape

    # Graph degrees are often integer-typed; output is always float.
    if not jnp.issubdtype(degree.dtype, jnp.floating):
        degree = degree.astype(jnp.float32)
    out_dtype = degree.dtype

    total = degree.size
    if total == 0:
        return jnp.zeros(orig_shape, out_dtype)

    # Lane-dense 2D view: C lanes (multiple of 128), rows padded to the tile.
    C = 512 if total >= 512 else 128
    rows = -(-total // C)
    MAX_TILE_R = 512
    if rows <= MAX_TILE_R:
        tile_r = -(-rows // 8) * 8          # single tile == full (padded) array
        padded_rows = tile_r
    else:
        tile_r = MAX_TILE_R                  # multiple of 8 sublanes
        padded_rows = -(-rows // tile_r) * tile_r
    padded_total = padded_rows * C

    flat = degree.reshape(-1)
    if padded_total != total:
        flat = jnp.concatenate(
            [flat, jnp.ones((padded_total - total,), out_dtype)])
    degree2d = flat.reshape(padded_rows, C)

    grid = (padded_rows // tile_r,)

    kernel = functools.partial(
        _degree_scaler_kernel,
        alpha=alpha,
        inv_avg_log_degree=1.0 / float(avg_log_degree),
    )

    itemsize = jnp.dtype(out_dtype).itemsize
    out2d = pl.pallas_call(
        kernel,
        out_shape=jax.ShapeDtypeStruct((padded_rows, C), out_dtype),
        grid=grid,
        in_specs=[pl.BlockSpec((tile_r, C), lambda i: (i, 0))],
        out_specs=pl.BlockSpec((tile_r, C), lambda i: (i, 0)),
        compiler_params=pltpu.CompilerParams(
            dimension_semantics=("parallel",)),
        cost_estimate=pl.CostEstimate(
            flops=2 * total,
            transcendentals=total,
            bytes_accessed=2 * total * itemsize,
        ),
    )(degree2d)

    return out2d.reshape(-1)[:total].reshape(orig_shape)


if __name__ == "__main__":
    key = jax.random.PRNGKey(0)
    avg_log_degree = 1.3
    alpha = 2

    # Small synthetic "degree" tensor: (8, 128) non-negative floats.
    degree = jax.random.uniform(key, (8, 128), dtype=jnp.float32,
                                minval=0.0, maxval=10.0)

    out = jax.block_until_ready(
        degree_scaler(degree, alpha=alpha, avg_log_degree=avg_log_degree))
    ref = (jnp.log(degree + 1.0) / avg_log_degree) ** alpha
    assert out.shape == degree.shape and out.dtype == degree.dtype
    assert jnp.allclose(out, ref, rtol=1e-5, atol=1e-5)

    # alpha == 0 path: all ones (including degree == 0), matching torch x ** 0.
    degree0 = degree.at[0, 0].set(0.0)
    out0 = jax.block_until_ready(
        degree_scaler(degree0, alpha=0, avg_log_degree=avg_log_degree))
    assert jnp.allclose(out0, jnp.ones_like(degree0))

    # 1D ragged-size vector (exercises padding + lane-dense reshape).
    deg1d = jax.random.uniform(jax.random.PRNGKey(1), (1000,), dtype=jnp.float32,
                               minval=0.0, maxval=50.0)
    out1d = jax.block_until_ready(
        degree_scaler(deg1d, alpha=3, avg_log_degree=avg_log_degree))
    ref1d = (jnp.log(deg1d + 1.0) / avg_log_degree) ** 3
    assert out1d.shape == deg1d.shape
    assert jnp.allclose(out1d, ref1d, rtol=1e-5, atol=1e-5)

    # Integer-typed degrees (common for graphs): cast to float32 in wrapper.
    deg_int = jax.random.randint(jax.random.PRNGKey(2), (37,), 0, 20, dtype=jnp.int32)
    out_int = jax.block_until_ready(
        degree_scaler(deg_int, alpha=1, avg_log_degree=avg_log_degree))
    ref_int = jnp.log(deg_int.astype(jnp.float32) + 1.0) / avg_log_degree
    assert out_int.dtype == jnp.float32
    assert jnp.allclose(out_int, ref_int, rtol=1e-5, atol=1e-5)

    print("KERNEL_OK")
</pallas_src>

<mosaic_0001>
module attributes {stable_mosaic.version = 11 : i64} {
  func.func @_degree_scaler_kernel(%arg0: i32, %arg1: memref<8x512xf32, #tpu.memory_space<vmem>>, %arg2: memref<8x512xf32, #tpu.memory_space<vmem>>) attributes {dimension_semantics = [#tpu.dimension_semantics<parallel>], iteration_bounds = array<i64: 1>, scalar_prefetch = 0 : i64, scratch_operands = 0 : i64, tpu.core_type = #tpu.core_type<tc>, window_params = [{transform_indices = @transform_0, window_bounds = array<i64: 8, 512>}, {transform_indices = @transform_1, window_bounds = array<i64: 8, 512>}]} {
    %c0 = arith.constant 0 : index
    %c0_0 = arith.constant 0 : index
    %0 = vector.load %arg1[%c0, %c0_0] : memref<8x512xf32, #tpu.memory_space<vmem>>, vector<8x512xf32>
    %cst = arith.constant 1.000000e+00 : f32
    %1 = vector.broadcast %cst : f32 to vector<8x512xf32>
    %2 = arith.addf %0, %1 : vector<8x512xf32>
    %3 = math.log %2 : vector<8x512xf32>
    %cst_1 = arith.constant 0.769230782 : f32
    %4 = vector.broadcast %cst_1 : f32 to vector<8x512xf32>
    %5 = arith.mulf %3, %4 : vector<8x512xf32>
    %6 = arith.mulf %5, %5 : vector<8x512xf32>
    %c0_2 = arith.constant 0 : index
    %c0_3 = arith.constant 0 : index
    %7 = vector.load %arg2[%c0_2, %c0_3] : memref<8x512xf32, #tpu.memory_space<vmem>>, vector<8x512xf32>
    tpu.vector_store %arg2[%c0_2, %c0_3], %6 {strides = array<i32>} : memref<8x512xf32, #tpu.memory_space<vmem>>, vector<8x512xf32>,
    return
  }
  func.func @transform_0(%arg0: i32) -> (i32, i32) {
    %c0_i32 = arith.constant 0 : i32
    %c0_i32_0 = arith.constant 0 : i32
    return %arg0, %c0_i32 : i32, i32
  }
  func.func @transform_1(%arg0: i32) -> (i32, i32) {
    %c0_i32 = arith.constant 0 : i32
    %c0_i32_0 = arith.constant 0 : i32
    return %arg0, %c0_i32 : i32, i32
  }
}

</mosaic_0001>

<llo_original>
// kernel: tpu_custom_call.1
$region0: #{tpu_custom_call.1}
  #allocation0 [shape = 'u32[]', space=smem, size = 0x4, offset = 0x4, fixed_abs, tag = 'smem constant byte address 0x4 - core index']
  #allocation1 [shape = 'u32[144,128]{1,0:T(1,128)}', space=vmem, size = 0x12000, scoped, tag = 'internal scratch']
  %s0 = inlined_call_operand.hbm [shape: f32[8,512], index: 0, kind: input, shape index: {}]
  %s1 = inlined_call_operand.hbm [shape: f32[8,512], index: 1, kind: output, shape index: {}]
  %s2 = sld [smem:[#allocation0]]
  $region18: #{tpu_custom_call.1} parent=0
    _
  %s4 = ssub.s32 1, %s2
  %s5 = scalar_select 0, %s4, %s2
  $region1: #{tpu_custom_call.1} parent=0
    #allocation2 [shape = 'u8[16384]{0}', space=vmem, size = 0x4000, scoped, tag = 'input window, operand 0, single buffered']
    #allocation3 [shape = 's32[1]{0}', space=sflag, size = 0x4, scoped, tag = 'scoped memory for tpu_custom_call.1']
    #allocation4 [shape = 's32[1]{0}', space=sflag, size = 0x4, scoped, tag = 'scoped memory for tpu_custom_call.1']
    #allocation5 [shape = 'u8[16384]{0}', space=vmem, size = 0x4000, scoped, tag = 'output window, operand 0, single buffered']
    %6 = vsyncpa [#allocation3], 0
    %7 = vsyncpa [#allocation4], 0
    // Predicated region
    $region2: #{tpu_custom_call.1} parent=1 // pred_check
      _
    $region3: #{tpu_custom_call.1} parent=1 // pred_check_branch
      %9 = sbr.rel (0) target = $region5
    $region4: #{tpu_custom_call.1} parent=1 // pred_region
      %s11 = ssub.s32 512, 512
      %12 = vsyncadd [#allocation3], %s11
      %s14 = sshll.u32 [#allocation2], 4
      %s15 = int_to_ptr.vmem [resolvable:$true] %s14
      %17 = dma.hbm_to_vmem [thread:$0]  %s0, 512, %s15, [#allocation3]
    $region5: #{tpu_custom_call.1} parent=1 // pred_fallthru
      _
    // Predicated region
    $region6: #{tpu_custom_call.1} parent=1 // pred_check
      _
    $region7: #{tpu_custom_call.1} parent=1 // pred_check_branch
      %19 = sbr.rel (0) target = $region9
    $region8: #{tpu_custom_call.1} parent=1 // pred_region
      %20 = dma.done [#allocation3], 512
    $region9: #{tpu_custom_call.1} parent=1 // pred_fallthru
      _
    %v21 = vld [vmem:[#allocation2] sm:$0xff]
    %v22 = vld [vmem:[#allocation2 + $0x8] sm:$0xff]
    %v23 = vld [vmem:[#allocation2 + $0x10] sm:$0xff]
    %v24 = vld [vmem:[#allocation2 + $0x18] sm:$0xff]
    %v25 = vadd.f32 %v21, 1.0
    %v26 = vadd.f32 %v22, 1.0
    %v27 = vadd.f32 %v23, 1.0
    %v28 = vadd.f32 %v24, 1.0
    %v29 = vlog2.pop %v25
    %v30 = vmul.f32 %v29, 0.6931472
    %v31 = vlog2.pop %v26
    %v32 = vmul.f32 %v31, 0.6931472
    %v33 = vlog2.pop %v27
    %v34 = vmul.f32 %v33, 0.6931472
    %v35 = vlog2.pop %v28
    %v36 = vmul.f32 %v35, 0.6931472
    %v37 = vmul.f32 %v30, 0.7692308
    %v38 = vmul.f32 %v32, 0.7692308
    %v39 = vmul.f32 %v34, 0.7692308
    %v40 = vmul.f32 %v36, 0.7692308
    %v41 = vmul.f32 %v37, %v37
    %v42 = vmul.f32 %v38, %v38
    %v43 = vmul.f32 %v39, %v39
    %v44 = vmul.f32 %v40, %v40
    %45 = vst [vmem:[#allocation5] sm:$0xff] %v41
    %46 = vst [vmem:[#allocation5 + $0x8] sm:$0xff] %v42
    %47 = vst [vmem:[#allocation5 + $0x10] sm:$0xff] %v43
    %48 = vst [vmem:[#allocation5 + $0x18] sm:$0xff] %v44
    // Predicated region
    $region10: #{tpu_custom_call.1} parent=1 // pred_check
      _
    $region11: #{tpu_custom_call.1} parent=1 // pred_check_branch
      %50 = sbr.rel (0) target = $region13
    $region12: #{tpu_custom_call.1} parent=1 // pred_region
      %s52 = ssub.s32 512, 512
      %53 = vsyncadd [#allocation4], %s52
      %s55 = sshll.u32 [#allocation5], 4
      %s56 = int_to_ptr.vmem [resolvable:$true] %s55
      %58 = dma.vmem_to_hbm [thread:$0]  %s56, 512, %s1, [#allocation4]
    $region13: #{tpu_custom_call.1} parent=1 // pred_fallthru
      _
    // Predicated region
    $region14: #{tpu_custom_call.1} parent=1 // pred_check
      _
    $region15: #{tpu_custom_call.1} parent=1 // pred_check_branch
      %60 = sbr.rel (0) target = $region17
    $region16: #{tpu_custom_call.1} parent=1 // pred_region
      %61 = dma.done [#allocation4], 512
    $region17: #{tpu_custom_call.1} parent=1 // pred_fallthru
      _
    %62 = vsyncpa [#allocation3], 1
    %63 = vsyncpa [#allocation4], 1

</llo_original>
